<compile_context>
chip_gen: v6e
topology: v6e:2x2x1
jax: 0.10.0
libtpu: 0.0.40
codegen_flags: <defaults>
</compile_context>

<pallas_src>
import jax
import jax.numpy as jnp
from jax.experimental import pallas as pl
from jax.experimental.pallas import tpu as pltpu

IN_DIM = 110
H1_DIM = 200
H2_DIM = 50
OUT_DIM = 6
OUT_PAD = 128        # lane-dense width used for the last matmul + softmax (VMEM only)
OUT_STORE = 8        # HBM output width (sliced to 6 in the wrapper)
NEG_BIG = -1e30      # softmax padding bias (exp -> 0 for padded lanes)


def _round_up(n, m):
    return ((n + m - 1) // m) * m


def mlp_kernel(x_ref, w1_ref, b1_ref, w2_ref, b2_ref, w3_ref, b3_ref, o_ref):
    # Layer 1: Linear(110, 200) + sigmoid (tanh form -> single EUP op)
    x = x_ref[...].astype(jnp.bfloat16)
    h1 = jnp.dot(x, w1_ref[...], preferred_element_type=jnp.float32) + b1_ref[...]
    h1 = 0.5 * (jnp.tanh(0.5 * h1) + 1.0)

    # Layer 2: Linear(200, 50) + sigmoid
    h2 = jnp.dot(h1.astype(jnp.bfloat16), w2_ref[...],
                 preferred_element_type=jnp.float32) + b2_ref[...]
    h2 = 0.5 * (jnp.tanh(0.5 * h2) + 1.0)

    # Layer 3: Linear(50, 6) padded to 128 lanes in VMEM + softmax over last axis.
    # Padded columns have weight 0 and bias -1e30 -> exp(...) == 0, so the
    # softmax over the real 6 lanes is unchanged.
    logits = jnp.dot(h2.astype(jnp.bfloat16), w3_ref[...],
                     preferred_element_type=jnp.float32) + b3_ref[...]
    m = jnp.max(logits, axis=-1, keepdims=True)
    e = jnp.exp(logits - m)
    s = jnp.sum(e, axis=-1, keepdims=True)
    probs = e * pl.reciprocal(s, approx=True)
    # Only the first 8 lanes ever reach HBM (lanes 6,7 are exactly 0).
    o_ref[...] = probs[:, :OUT_STORE]


def mlp_forward(x, w1, b1, w2, b2, w3, b3, *, tile_b=4096):
    B = x.shape[0]
    # Keep >= 2 grid steps whenever the batch allows it (v7x megacore: the
    # "parallel" batch axis is how the second TensorCore gets work), while
    # keeping tiles sublane-aligned (multiple of 8 rows).
    tile_cap = max(8, _round_up(pl.cdiv(B, 2), 8))
    tile_b = max(8, min(tile_b, tile_cap))
    grid = (pl.cdiv(B, tile_b),)

    # One-time weight prep: bf16 weights, f32 biases, lane-dense last layer.
    w1b = w1.astype(jnp.bfloat16)
    w2b = w2.astype(jnp.bfloat16)
    w3p = jnp.zeros((H2_DIM, OUT_PAD), jnp.bfloat16).at[:, :OUT_DIM].set(
        w3.astype(jnp.bfloat16))
    b1r = jnp.reshape(b1, (1, H1_DIM)).astype(jnp.float32)
    b2r = jnp.reshape(b2, (1, H2_DIM)).astype(jnp.float32)
    b3p = jnp.full((1, OUT_PAD), NEG_BIG, jnp.float32).at[:, :OUT_DIM].set(
        jnp.reshape(b3, (1, OUT_DIM)).astype(jnp.float32))

    resident = lambda i: (0, 0)   # weights/biases stay VMEM-resident across tiles

    flops = 2 * B * (IN_DIM * H1_DIM + H1_DIM * H2_DIM + H2_DIM * OUT_DIM)
    transcendentals = B * (H1_DIM + H2_DIM + OUT_DIM)
    bytes_accessed = (B * IN_DIM * 4                       # x read (f32)
                      + B * OUT_STORE * 4                  # output write (f32, 8 lanes)
                      + (IN_DIM * H1_DIM + H1_DIM * H2_DIM + H2_DIM * OUT_PAD) * 2
                      + (H1_DIM + H2_DIM + OUT_PAD) * 4)
    cost = pl.CostEstimate(flops=flops, transcendentals=transcendentals,
                           bytes_accessed=bytes_accessed)

    out = pl.pallas_call(
        mlp_kernel,
        grid=grid,
        out_shape=jax.ShapeDtypeStruct((B, OUT_STORE), jnp.float32),
        in_specs=[
            pl.BlockSpec((tile_b, IN_DIM), lambda i: (i, 0)),   # x: tiled over batch
            pl.BlockSpec((IN_DIM, H1_DIM), resident),           # W1
            pl.BlockSpec((1, H1_DIM), resident),                # b1
            pl.BlockSpec((H1_DIM, H2_DIM), resident),           # W2
            pl.BlockSpec((1, H2_DIM), resident),                # b2
            pl.BlockSpec((H2_DIM, OUT_PAD), resident),          # W3 (padded)
            pl.BlockSpec((1, OUT_PAD), resident),               # b3 (padded, -1e30)
        ],
        out_specs=pl.BlockSpec((tile_b, OUT_STORE), lambda i: (i, 0)),
        compiler_params=pltpu.CompilerParams(
            dimension_semantics=("parallel",)),
        cost_estimate=cost,
    )(x, w1b, b1r, w2b, b2r, w3p, b3p)

    return out[:, :OUT_DIM]


def init_params(key):
    """Deterministic parameter init mimicking nn.Linear's uniform(-1/sqrt(fan_in), +)."""
    dims = [(IN_DIM, H1_DIM), (H1_DIM, H2_DIM), (H2_DIM, OUT_DIM)]
    params = []
    for i, (fan_in, fan_out) in enumerate(dims):
        kw, kb = jax.random.split(jax.random.fold_in(key, i))
        bound = 1.0 / jnp.sqrt(jnp.float32(fan_in))
        w = jax.random.uniform(kw, (fan_in, fan_out), jnp.float32, -bound, bound)
        b = jax.random.uniform(kb, (1, fan_out), jnp.float32, -bound, bound)
        params += [w, b]
    return params


if __name__ == "__main__":
    key = jax.random.PRNGKey(0)
    k_x, k_p = jax.random.split(key)

    B = 8  # small batch
    x = jax.random.normal(k_x, (B, IN_DIM), jnp.float32)
    w1, b1, w2, b2, w3, b3 = init_params(k_p)

    y = mlp_forward(x, w1, b1, w2, b2, w3, b3)
    y = jax.block_until_ready(y)

    # Sanity checks against a pure-JAX f32 reference (looser tolerance because
    # the kernel uses bf16 matmul inputs and an approx EUP reciprocal).
    h1 = jax.nn.sigmoid(x @ w1 + b1)
    h2 = jax.nn.sigmoid(h1 @ w2 + b2)
    y_ref = jax.nn.softmax(h2 @ w3 + b3, axis=-1)
    assert y.shape == (B, OUT_DIM)
    assert jnp.allclose(y, y_ref, atol=2e-2), "mismatch vs reference"
    assert jnp.allclose(jnp.sum(y, axis=-1), 1.0, atol=1e-2)

    print("KERNEL_OK")
</pallas_src>

<mosaic_0001>
module attributes {stable_mosaic.version = 11 : i64} {
  func.func @mlp_kernel(%arg0: i32, %arg1: memref<8x110xf32, #tpu.memory_space<vmem>>, %arg2: memref<110x200xbf16, #tpu.memory_space<vmem>>, %arg3: memref<1x200xf32, #tpu.memory_space<vmem>>, %arg4: memref<200x50xbf16, #tpu.memory_space<vmem>>, %arg5: memref<1x50xf32, #tpu.memory_space<vmem>>, %arg6: memref<50x128xbf16, #tpu.memory_space<vmem>>, %arg7: memref<1x128xf32, #tpu.memory_space<vmem>>, %arg8: memref<8x8xf32, #tpu.memory_space<vmem>>) attributes {dimension_semantics = [#tpu.dimension_semantics<parallel>], iteration_bounds = array<i64: 1>, scalar_prefetch = 0 : i64, scratch_operands = 0 : i64, tpu.core_type = #tpu.core_type<tc>, window_params = [{transform_indices = @transform_0, window_bounds = array<i64: 8, 110>}, {pipeline_mode = #tpu.pipeline_mode<synchronous>, transform_indices = @transform_1, window_bounds = array<i64: 110, 200>}, {pipeline_mode = #tpu.pipeline_mode<synchronous>, transform_indices = @transform_2, window_bounds = array<i64: 1, 200>}, {pipeline_mode = #tpu.pipeline_mode<synchronous>, transform_indices = @transform_3, window_bounds = array<i64: 200, 50>}, {pipeline_mode = #tpu.pipeline_mode<synchronous>, transform_indices = @transform_4, window_bounds = array<i64: 1, 50>}, {pipeline_mode = #tpu.pipeline_mode<synchronous>, transform_indices = @transform_5, window_bounds = array<i64: 50, 128>}, {pipeline_mode = #tpu.pipeline_mode<synchronous>, transform_indices = @transform_6, window_bounds = array<i64: 1, 128>}, {transform_indices = @transform_7, window_bounds = array<i64: 8, 8>}]} {
    %c0 = arith.constant 0 : index
    %c0_0 = arith.constant 0 : index
    %0 = vector.load %arg1[%c0, %c0_0] : memref<8x110xf32, #tpu.memory_space<vmem>>, vector<8x110xf32>
    %1 = arith.truncf %0 : vector<8x110xf32> to vector<8x110xbf16>
    %c0_1 = arith.constant 0 : index
    %c0_2 = arith.constant 0 : index
    %2 = vector.load %arg2[%c0_1, %c0_2] : memref<110x200xbf16, #tpu.memory_space<vmem>>, vector<110x200xbf16>
    %cst = arith.constant dense<0.000000e+00> : vector<8x200xf32>
    %3 = tpu.matmul %1, %2, %cst {dimension_numbers = #tpu.dot_dimension_numbers<[1], [0], [0], [1], [0, 0, 1, 1], [], []>} : vector<8x110xbf16>, vector<110x200xbf16>, vector<8x200xf32> -> vector<8x200xf32>
    %c0_3 = arith.constant 0 : index
    %c0_4 = arith.constant 0 : index
    %4 = vector.load %arg3[%c0_3, %c0_4] : memref<1x200xf32, #tpu.memory_space<vmem>>, vector<1x200xf32>
    %5 = vector.broadcast %4 : vector<1x200xf32> to vector<8x200xf32>
    %6 = arith.addf %3, %5 : vector<8x200xf32>
    %cst_5 = arith.constant 5.000000e-01 : f32
    %7 = vector.broadcast %cst_5 : f32 to vector<8x200xf32>
    %8 = arith.mulf %7, %6 : vector<8x200xf32>
    %9 = math.tanh %8 : vector<8x200xf32>
    %cst_6 = arith.constant 1.000000e+00 : f32
    %10 = vector.broadcast %cst_6 : f32 to vector<8x200xf32>
    %11 = arith.addf %9, %10 : vector<8x200xf32>
    %cst_7 = arith.constant 5.000000e-01 : f32
    %12 = vector.broadcast %cst_7 : f32 to vector<8x200xf32>
    %13 = arith.mulf %12, %11 : vector<8x200xf32>
    %14 = arith.truncf %13 : vector<8x200xf32> to vector<8x200xbf16>
    %c0_8 = arith.constant 0 : index
    %c0_9 = arith.constant 0 : index
    %15 = vector.load %arg4[%c0_8, %c0_9] : memref<200x50xbf16, #tpu.memory_space<vmem>>, vector<200x50xbf16>
    %cst_10 = arith.constant dense<0.000000e+00> : vector<8x50xf32>
    %16 = tpu.matmul %14, %15, %cst_10 {dimension_numbers = #tpu.dot_dimension_numbers<[1], [0], [0], [1], [0, 0, 1, 1], [], []>} : vector<8x200xbf16>, vector<200x50xbf16>, vector<8x50xf32> -> vector<8x50xf32>
    %c0_11 = arith.constant 0 : index
    %c0_12 = arith.constant 0 : index
    %17 = vector.load %arg5[%c0_11, %c0_12] : memref<1x50xf32, #tpu.memory_space<vmem>>, vector<1x50xf32>
    %18 = vector.broadcast %17 : vector<1x50xf32> to vector<8x50xf32>
    %19 = arith.addf %16, %18 : vector<8x50xf32>
    %cst_13 = arith.constant 5.000000e-01 : f32
    %20 = vector.broadcast %cst_13 : f32 to vector<8x50xf32>
    %21 = arith.mulf %20, %19 : vector<8x50xf32>
    %22 = math.tanh %21 : vector<8x50xf32>
    %cst_14 = arith.constant 1.000000e+00 : f32
    %23 = vector.broadcast %cst_14 : f32 to vector<8x50xf32>
    %24 = arith.addf %22, %23 : vector<8x50xf32>
    %cst_15 = arith.constant 5.000000e-01 : f32
    %25 = vector.broadcast %cst_15 : f32 to vector<8x50xf32>
    %26 = arith.mulf %25, %24 : vector<8x50xf32>
    %27 = arith.truncf %26 : vector<8x50xf32> to vector<8x50xbf16>
    %c0_16 = arith.constant 0 : index
    %c0_17 = arith.constant 0 : index
    %28 = vector.load %arg6[%c0_16, %c0_17] : memref<50x128xbf16, #tpu.memory_space<vmem>>, vector<50x128xbf16>
    %cst_18 = arith.constant dense<0.000000e+00> : vector<8x128xf32>
    %29 = tpu.matmul %27, %28, %cst_18 {dimension_numbers = #tpu.dot_dimension_numbers<[1], [0], [0], [1], [0, 0, 1, 1], [], []>} : vector<8x50xbf16>, vector<50x128xbf16>, vector<8x128xf32> -> vector<8x128xf32>
    %c0_19 = arith.constant 0 : index
    %c0_20 = arith.constant 0 : index
    %30 = vector.load %arg7[%c0_19, %c0_20] : memref<1x128xf32, #tpu.memory_space<vmem>>, vector<1x128xf32>
    %31 = vector.broadcast %30 : vector<1x128xf32> to vector<8x128xf32>
    %32 = arith.addf %29, %31 : vector<8x128xf32>
    %cst_21 = arith.constant dense<0xFF800000> : vector<8xf32>
    %33 = vector.multi_reduction <maximumf>, %32, %cst_21 [1] : vector<8x128xf32> to vector<8xf32>
    %34 = vector.shape_cast %33 : vector<8xf32> to vector<8x1xf32>
    %35 = vector.broadcast %34 : vector<8x1xf32> to vector<8x128xf32>
    %36 = arith.subf %32, %35 : vector<8x128xf32>
    %37 = math.exp %36 : vector<8x128xf32>
    %cst_22 = arith.constant dense<0.000000e+00> : vector<8xf32>
    %38 = vector.multi_reduction <add>, %37, %cst_22 [1] : vector<8x128xf32> to vector<8xf32>
    %39 = vector.shape_cast %38 : vector<8xf32> to vector<8x1xf32>
    %40 = tpu.reciprocal %39 {approx = true} : vector<8x1xf32> -> vector<8x1xf32>
    %41 = vector.broadcast %40 : vector<8x1xf32> to vector<8x128xf32>
    %42 = arith.mulf %37, %41 : vector<8x128xf32>
    %43 = vector.extract_strided_slice %42 {offsets = [0, 0], sizes = [8, 8], strides = [1, 1]} : vector<8x128xf32> to vector<8x8xf32>
    %c0_23 = arith.constant 0 : index
    %c0_24 = arith.constant 0 : index
    %44 = vector.load %arg8[%c0_23, %c0_24] : memref<8x8xf32, #tpu.memory_space<vmem>>, vector<8x8xf32>
    tpu.vector_store %arg8[%c0_23, %c0_24], %43 {strides = array<i32>} : memref<8x8xf32, #tpu.memory_space<vmem>>, vector<8x8xf32>,
    return
  }
  func.func @transform_0(%arg0: i32) -> (i32, i32) {
    %c0_i32 = arith.constant 0 : i32
    %c0_i32_0 = arith.constant 0 : i32
    return %arg0, %c0_i32 : i32, i32
  }
  func.func @transform_1(%arg0: i32) -> (i32, i32) {
    %c0_i32 = arith.constant 0 : i32
    %c0_i32_0 = arith.constant 0 : i32
    %c0_i32_1 = arith.constant 0 : i32
    return %c0_i32, %c0_i32_0 : i32, i32
  }
  func.func @transform_2(%arg0: i32) -> (i32, i32) {
    %c0_i32 = arith.constant 0 : i32
    %c0_i32_0 = arith.constant 0 : i32
    %c0_i32_1 = arith.constant 0 : i32
    return %c0_i32, %c0_i32_0 : i32, i32
  }
  func.func @transform_3(%arg0: i32) -> (i32, i32) {
    %c0_i32 = arith.constant 0 : i32
    %c0_i32_0 = arith.constant 0 : i32
    %c0_i32_1 = arith.constant 0 : i32
    return %c0_i32, %c0_i32_0 : i32, i32
  }
  func.func @transform_4(%arg0: i32) -> (i32, i32) {
    %c0_i32 = arith.constant 0 : i32
    %c0_i32_0 = arith.constant 0 : i32
    %c0_i32_1 = arith.constant 0 : i32
    return %c0_i32, %c0_i32_0 : i32, i32
  }
  func.func @transform_5(%arg0: i32) -> (i32, i32) {
    %c0_i32 = arith.constant 0 : i32
    %c0_i32_0 = arith.constant 0 : i32
    %c0_i32_1 = arith.constant 0 : i32
    return %c0_i32, %c0_i32_0 : i32, i32
  }
  func.func @transform_6(%arg0: i32) -> (i32, i32) {
    %c0_i32 = arith.constant 0 : i32
    %c0_i32_0 = arith.constant 0 : i32
    %c0_i32_1 = arith.constant 0 : i32
    return %c0_i32, %c0_i32_0 : i32, i32
  }
  func.func @transform_7(%arg0: i32) -> (i32, i32) {
    %c0_i32 = arith.constant 0 : i32
    %c0_i32_0 = arith.constant 0 : i32
    return %arg0, %c0_i32 : i32, i32
  }
}

</mosaic_0001>

<llo_original>
// kernel: tpu_custom_call.1
$region0: #{tpu_custom_call.1}
  #allocation0 [shape = 'u32[]', space=smem, size = 0x4, offset = 0x4, fixed_abs, tag = 'smem constant byte address 0x4 - core index']
  #allocation1 [shape = 'u32[144,128]{1,0:T(1,128)}', space=vmem, size = 0x12000, scoped, tag = 'internal scratch']
  %s0 = inlined_call_operand.vmem [shape: f32[8,110], index: 0, kind: input, shape index: {}]
  %s1 = inlined_call_operand.vmem [shape: bf16[110,200], index: 1, kind: input, shape index: {}]
  %s2 = inlined_call_operand.vmem [shape: f32[1,200], index: 2, kind: input, shape index: {}]
  %s3 = inlined_call_operand.vmem [shape: bf16[200,50], index: 3, kind: input, shape index: {}]
  %s4 = inlined_call_operand.vmem [shape: f32[1,50], index: 4, kind: input, shape index: {}]
  %s5 = inlined_call_operand.vmem [shape: bf16[50,128], index: 5, kind: input, shape index: {}]
  %s6 = inlined_call_operand.vmem [shape: f32[1,128], index: 6, kind: input, shape index: {}]
  %s7 = inlined_call_operand.hbm [shape: f32[8,8], index: 7, kind: output, shape index: {}]
  %s8 = sld [smem:[#allocation0]]
  $region38: #{tpu_custom_call.1} parent=0
    _
  %s10 = ssub.s32 1, %s8
  %s11 = scalar_select 0, %s10, %s8
  $region1: #{tpu_custom_call.1} parent=0
    #allocation2 [shape = 'u8[4096]{0}', space=vmem, size = 0x1000, scoped, tag = 'output window, operand 0, single buffered']
    #allocation3 [shape = 's32[1]{0}', space=sflag, size = 0x4, scoped, tag = 'scoped memory for tpu_custom_call.1']
    %12 = vsyncpa [#allocation3], 0
    // Predicated region
    $region2: #{tpu_custom_call.1} parent=1 // pred_check
      _
    $region3: #{tpu_custom_call.1} parent=1 // pred_check_branch
      %14 = sbr.rel (0) target = $region5
    $region4: #{tpu_custom_call.1} parent=1 // pred_region
      _
    $region5: #{tpu_custom_call.1} parent=1 // pred_fallthru
      _
    // Predicated region
    $region6: #{tpu_custom_call.1} parent=1 // pred_check
      _
    $region7: #{tpu_custom_call.1} parent=1 // pred_check_branch
      %16 = sbr.rel (0) target = $region9
    $region8: #{tpu_custom_call.1} parent=1 // pred_region
      _
    $region9: #{tpu_custom_call.1} parent=1 // pred_fallthru
      _
    // Predicated region
    $region10: #{tpu_custom_call.1} parent=1 // pred_check
      _
    $region11: #{tpu_custom_call.1} parent=1 // pred_check_branch
      %18 = sbr.rel (0) target = $region13
    $region12: #{tpu_custom_call.1} parent=1 // pred_region
      _
    $region13: #{tpu_custom_call.1} parent=1 // pred_fallthru
      _
    // Predicated region
    $region14: #{tpu_custom_call.1} parent=1 // pred_check
      _
    $region15: #{tpu_custom_call.1} parent=1 // pred_check_branch
      %20 = sbr.rel (0) target = $region17
    $region16: #{tpu_custom_call.1} parent=1 // pred_region
      _
    $region17: #{tpu_custom_call.1} parent=1 // pred_fallthru
      _
    // Predicated region
    $region18: #{tpu_custom_call.1} parent=1 // pred_check
      _
    $region19: #{tpu_custom_call.1} parent=1 // pred_check_branch
      %22 = sbr.rel (0) target = $region21
    $region20: #{tpu_custom_call.1} parent=1 // pred_region
      _
    $region21: #{tpu_custom_call.1} parent=1 // pred_fallthru
      _
    // Predicated region
    $region22: #{tpu_custom_call.1} parent=1 // pred_check
      _
    $region23: #{tpu_custom_call.1} parent=1 // pred_check_branch
      %24 = sbr.rel (0) target = $region25
    $region24: #{tpu_custom_call.1} parent=1 // pred_region
      _
    $region25: #{tpu_custom_call.1} parent=1 // pred_fallthru
      _
    // Predicated region
    $region26: #{tpu_custom_call.1} parent=1 // pred_check
      _
    $region27: #{tpu_custom_call.1} parent=1 // pred_check_branch
      %26 = sbr.rel (0) target = $region29
    $region28: #{tpu_custom_call.1} parent=1 // pred_region
      _
    $region29: #{tpu_custom_call.1} parent=1 // pred_fallthru
      _
    %v28 = vld [vmem:[%s0] sm:$0xff]
    %v29 = vpack.c.bf16 %v28, %v28
    %v30 = vld [vmem:[%s1] sm:$0xff]
    %v31 = vld [vmem:[%s1 + $0x8] sm:$0xff]
    %v32 = vld [vmem:[%s1 + $0x10] sm:$0xff]
    %v33 = vld [vmem:[%s1 + $0x18] sm:$0xff]
    %v34 = vld [vmem:[%s1 + $0x20] sm:$0xff]
    %v35 = vld [vmem:[%s1 + $0x28] sm:$0xff]
    %v36 = vld [vmem:[%s1 + $0x30] sm:$0xff]
    %v37 = vld [vmem:[%s1 + $0x38] sm:$0xff]
    %v38 = vld [vmem:[%s1 + $0x40] sm:$0xff]
    %v39 = vld [vmem:[%s1 + $0x48] sm:$0xff]
    %v40 = vld [vmem:[%s1 + $0x50] sm:$0xff]
    %v41 = vld [vmem:[%s1 + $0x58] sm:$0xff]
    %v42 = vld [vmem:[%s1 + $0x60] sm:$0xff]
    %v43 = vld [vmem:[%s1 + $0x68] sm:$0x77]
    %v44 = vld [vmem:[%s2] sm:$0x3]
    %v46 = vlaneseq
    %v47 = vshrl.u32 %v46, 7
    %v48 = vsub.s32 0, %v47
    %v49 = vrot.slane %v44, %v48
    %v50 = vlaneseq
    %v51 = vshrl.u32 %v50, 7
    %v52 = vsub.s32 1, %v51
    %v53 = vrot.slane %v44, %v52
    %v70 = vunpack.c.l.b16 %v30
    %v71 = vunpack.c.h.b16 %v30
    %v72 = vunpack.c.l.b16 %v31
    %v73 = vunpack.c.h.b16 %v31
    %v74 = vunpack.c.l.b16 %v32
    %v75 = vunpack.c.h.b16 %v32
    %v76 = vunpack.c.l.b16 %v33
    %v77 = vunpack.c.h.b16 %v33
    %v78 = vunpack.c.l.b16 %v34
    %v79 = vunpack.c.h.b16 %v34
    %v80 = vunpack.c.l.b16 %v35
    %v81 = vunpack.c.h.b16 %v35
    %v82 = vunpack.c.l.b16 %v36
    %v83 = vunpack.c.h.b16 %v36
    %v84 = vunpack.c.l.b16 %v37
    %v85 = vunpack.c.h.b16 %v37
    %v86 = vunpack.c.l.b16 %v38
    %v87 = vunpack.c.h.b16 %v38
    %v88 = vunpack.c.l.b16 %v39
    %v89 = vunpack.c.h.b16 %v39
    %v90 = vunpack.c.l.b16 %v40
    %v91 = vunpack.c.h.b16 %v40
    %v92 = vunpack.c.l.b16 %v41
    %v93 = vunpack.c.h.b16 %v41
    %v94 = vunpack.c.l.b16 %v42
    %v95 = vunpack.c.h.b16 %v42
    %v96 = vunpack.c.l.b16 %v43
    %v97 = vunpack.c.h.b16 %v43
    %v98 = vpack.c.b16 %v72, %v70
    %v99 = vpack.c.b16 %v73, %v71
    %v100 = vpack.c.b16 %v76, %v74
    %v101 = vpack.c.b16 %v77, %v75
    %v102 = vpack.c.b16 %v80, %v78
    %v103 = vpack.c.b16 %v81, %v79
    %v104 = vpack.c.b16 %v84, %v82
    %v105 = vpack.c.b16 %v85, %v83
    %v106 = vpack.c.b16 %v88, %v86
    %v107 = vpack.c.b16 %v89, %v87
    %v108 = vpack.c.b16 %v92, %v90
    %v109 = vpack.c.b16 %v93, %v91
    %v110 = vpack.c.b16 %v96, %v94
    %v111 = vpack.c.b16 %v97, %v95
    %vm124 = vcmask 900096
    %v126 = vsel %vm124, %v29, 0
    %vm128 = vcmask 1046528
    %v130 = vsel %vm128, %v110, 0
    %v133 = vsel %vm128, %v111, 0
    %135 = vmatprep.subr.bf16.mxu0 0
    %136 = vmatpush1.bf16.msra.mxu0 0
    %137 = vmatprep.subr.bf16.mxu0 %v133
    %138 = vmatpush1.bf16.msra.mxu0 %v130
    %139 = vmatprep.subr.bf16.mxu0 %v109
    %140 = vmatpush1.bf16.msra.mxu0 %v108
    %141 = vmatprep.subr.bf16.mxu0 %v107
    %142 = vmatpush1.bf16.msra.mxu0 %v106
    %143 = vmatprep.subr.bf16.mxu0 %v105
    %144 = vmatpush1.bf16.msra.mxu0 %v104
    %145 = vmatprep.subr.bf16.mxu0 %v103
    %146 = vmatpush1.bf16.msra.mxu0 %v102
    %147 = vmatprep.subr.bf16.mxu0 %v101
    %148 = vmatpush1.bf16.msra.mxu0 %v100
    %149 = vmatprep.subr.bf16.mxu0 %v99
    %150 = vmatpush1.bf16.msra.mxu0 %v98
    %151 = vmatprep.subr.bf16.mxu0 0
    %152 = vmatpush2.bf16.msra.mxu0 0
    %153 = vmatprep.subr.bf16.mxu0 0
    %154 = vmatpush2.bf16.msra.mxu0 0
    %155 = vmatprep.subr.bf16.mxu0 0
    %156 = vmatpush2.bf16.msra.mxu0 0
    %157 = vmatprep.subr.bf16.mxu0 0
    %158 = vmatpush2.bf16.msra.mxu0 0
    %159 = vmatprep.subr.bf16.mxu0 0
    %160 = vmatpush2.bf16.msra.mxu0 0
    %161 = vmatprep.subr.bf16.mxu0 0
    %162 = vmatpush2.bf16.msra.mxu0 0
    %163 = vmatprep.subr.bf16.mxu0 0
    %164 = vmatpush2.bf16.msra.mxu0 0
    %165 = vmatprep.subr.bf16.mxu0 0
    %166 = vmatpush2.bf16.msra.mxu0 0
    %167 = vmatprep.mubr.bf16.mxu0 0
    %168 = vmatmul.mubr.bf16.gmra.mxu0 %v126
    %v169 = vpop.f32.mrf.mxu0
    %v170 = vadd.f32 %v49, %v169
    %v171 = vpop.f32.mrf.mxu0
    %v172 = vadd.f32 %v53, %v171
    %v173 = vpop.f32.mrf.mxu0
    %v174 = vpop.f32.mrf.mxu0
    %175 = vdwg.mxu0
    %v176 = vmul.f32 %v170, 0.5
    %v177 = vmul.f32 %v172, 0.5
    %v178 = vtanh.pop %v176
    %v179 = vtanh.pop %v177
    %v180 = vadd.f32 %v178, 1.0
    %v181 = vadd.f32 %v179, 1.0
    %v182 = vmul.f32 %v180, 0.5
    %v183 = vmul.f32 %v181, 0.5
    %v184 = vpack.c.bf16 %v182, %v182
    %v185 = vpack.c.bf16 %v183, %v183
    %v186 = vld [vmem:[%s3] sm:$0xf]
    %v187 = vld [vmem:[%s3 + $0x4] sm:$0xf]
    %v188 = vld [vmem:[%s3 + $0x8] sm:$0xf]
    %v189 = vld [vmem:[%s3 + $0xc] sm:$0xf]
    %v190 = vld [vmem:[%s3 + $0x10] sm:$0xf]
    %v191 = vld [vmem:[%s3 + $0x14] sm:$0xf]
    %v192 = vld [vmem:[%s3 + $0x18] sm:$0xf]
    %v193 = vld [vmem:[%s3 + $0x1c] sm:$0xf]
    %v194 = vld [vmem:[%s3 + $0x20] sm:$0xf]
    %v195 = vld [vmem:[%s3 + $0x24] sm:$0xf]
    %v196 = vld [vmem:[%s3 + $0x28] sm:$0xf]
    %v197 = vld [vmem:[%s3 + $0x2c] sm:$0xf]
    %v198 = vld [vmem:[%s3 + $0x30] sm:$0xf]
    %v199 = vld [vmem:[%s3 + $0x34] sm:$0xf]
    %v200 = vld [vmem:[%s3 + $0x38] sm:$0xf]
    %v201 = vld [vmem:[%s3 + $0x3c] sm:$0xf]
    %v202 = vld [vmem:[%s3 + $0x40] sm:$0xf]
    %v203 = vld [vmem:[%s3 + $0x44] sm:$0xf]
    %v204 = vld [vmem:[%s3 + $0x48] sm:$0xf]
    %v205 = vld [vmem:[%s3 + $0x4c] sm:$0xf]
    %v206 = vld [vmem:[%s3 + $0x50] sm:$0xf]
    %v207 = vld [vmem:[%s3 + $0x54] sm:$0xf]
    %v208 = vld [vmem:[%s3 + $0x58] sm:$0xf]
    %v209 = vld [vmem:[%s3 + $0x5c] sm:$0xf]
    %v210 = vld [vmem:[%s3 + $0x60] sm:$0xf]
    %v211 = vld [vmem:[%s4] sm:$0x1]
    %v213 = vlaneseq
    %v214 = vshrl.u32 %v213, 7
    %v215 = vsub.s32 0, %v214
    %v216 = vrot.slane %v211, %v215
    %v243 = vunpack.c.l.b16 %v186
    %v244 = vunpack.c.l.b16 %v187
    %v245 = vunpack.c.l.b16 %v188
    %v246 = vunpack.c.l.b16 %v189
    %v247 = vunpack.c.l.b16 %v190
    %v248 = vunpack.c.l.b16 %v191
    %v249 = vunpack.c.l.b16 %v192
    %v250 = vunpack.c.l.b16 %v193
    %v251 = vunpack.c.l.b16 %v194
    %v252 = vunpack.c.l.b16 %v195
    %v253 = vunpack.c.l.b16 %v196
    %v254 = vunpack.c.l.b16 %v197
    %v255 = vunpack.c.l.b16 %v198
    %v256 = vunpack.c.l.b16 %v199
    %v257 = vunpack.c.l.b16 %v200
    %v258 = vunpack.c.l.b16 %v201
    %v259 = vunpack.c.l.b16 %v202
    %v260 = vunpack.c.l.b16 %v203
    %v261 = vunpack.c.l.b16 %v204
    %v262 = vunpack.c.l.b16 %v205
    %v263 = vunpack.c.l.b16 %v206
    %v264 = vunpack.c.l.b16 %v207
    %v265 = vunpack.c.l.b16 %v208
    %v266 = vunpack.c.l.b16 %v209
    %v267 = vunpack.c.l.b16 %v210
    %v268 = vpack.c.b16 %v244, %v243
    %v269 = vpack.c.b16 %v246, %v245
    %v270 = vpack.c.b16 %v248, %v247
    %v271 = vpack.c.b16 %v250, %v249
    %v272 = vpack.c.b16 %v252, %v251
    %v273 = vpack.c.b16 %v254, %v253
    %v274 = vpack.c.b16 %v256, %v255
    %v275 = vpack.c.b16 %v258, %v257
    %v276 = vpack.c.b16 %v260, %v259
    %v277 = vpack.c.b16 %v262, %v261
    %v278 = vpack.c.b16 %v264, %v263
    %v279 = vpack.c.b16 %v266, %v265
    %v280 = vpack.c.b16 %v267, %v267
    %vm293 = vcmask 588800
    %v295 = vsel %vm293, %v185, 0
    %vm297 = vcmask 1043456
    %v299 = vsel %vm297, %v280, 0
    %301 = vmatprep.subr.bf16.mxu0 0
    %302 = vmatpush1.bf16.msra.mxu0 %v275
    %303 = vmatprep.subr.bf16.mxu0 0
    %304 = vmatpush1.bf16.msra.mxu0 %v274
    %305 = vmatprep.subr.bf16.mxu0 0
    %306 = vmatpush1.bf16.msra.mxu0 %v273
    %307 = vmatprep.subr.bf16.mxu0 0
    %308 = vmatpush1.bf16.msra.mxu0 %v272
    %309 = vmatprep.subr.bf16.mxu0 0
    %310 = vmatpush1.bf16.msra.mxu0 %v271
    %311 = vmatprep.subr.bf16.mxu0 0
    %312 = vmatpush1.bf16.msra.mxu0 %v270
    %313 = vmatprep.subr.bf16.mxu0 0
    %314 = vmatpush1.bf16.msra.mxu0 %v269
    %315 = vmatprep.subr.bf16.mxu0 0
    %316 = vmatpush1.bf16.msra.mxu0 %v268
    %317 = vmatprep.subr.bf16.mxu0 0
    %318 = vmatpush2.bf16.msra.mxu0 0
    %319 = vmatprep.subr.bf16.mxu0 0
    %320 = vmatpush2.bf16.msra.mxu0 0
    %321 = vmatprep.subr.bf16.mxu0 0
    %322 = vmatpush2.bf16.msra.mxu0 0
    %323 = vmatprep.subr.bf16.mxu0 0
    %324 = vmatpush2.bf16.msra.mxu0 %v299
    %325 = vmatprep.subr.bf16.mxu0 0
    %326 = vmatpush2.bf16.msra.mxu0 %v279
    %327 = vmatprep.subr.bf16.mxu0 0
    %328 = vmatpush2.bf16.msra.mxu0 %v278
    %329 = vmatprep.subr.bf16.mxu0 0
    %330 = vmatpush2.bf16.msra.mxu0 %v277
    %331 = vmatprep.subr.bf16.mxu0 0
    %332 = vmatpush2.bf16.msra.mxu0 %v276
    %333 = vmatprep.mubr.bf16.mxu0 %v295
    %334 = vmatmul.mubr.bf16.gmra.mxu0 %v184
    %v335 = vpop.f32.mrf.mxu0
    %v336 = vadd.f32 %v216, %v335
    %v337 = vpop.f32.mrf.mxu0
    %v338 = vpop.f32.mrf.mxu0
    %v339 = vpop.f32.mrf.mxu0
    %340 = vdwg.mxu0
    %v341 = vmul.f32 %v336, 0.5
    %v342 = vtanh.pop %v341
    %v343 = vadd.f32 %v342, 1.0
    %v344 = vmul.f32 %v343, 0.5
    %v345 = vpack.c.bf16 %v344, %v344
    %v346 = vld [vmem:[%s5] sm:$0xf]
    %v347 = vld [vmem:[%s5 + $0x4] sm:$0xf]
    %v348 = vld [vmem:[%s5 + $0x8] sm:$0xf]
    %v349 = vld [vmem:[%s5 + $0xc] sm:$0xf]
    %v350 = vld [vmem:[%s5 + $0x10] sm:$0xf]
    %v351 = vld [vmem:[%s5 + $0x14] sm:$0xf]
    %v352 = vld [vmem:[%s5 + $0x18] sm:$0x1]
    %v353 = vld [vmem:[%s6] sm:$0x1]
    %v355 = vlaneseq
    %v356 = vshrl.u32 %v355, 7
    %v357 = vsub.s32 0, %v356
    %v358 = vrot.slane %v353, %v357
    %v367 = vunpack.c.l.b16 %v346
    %v368 = vunpack.c.l.b16 %v347
    %v369 = vunpack.c.l.b16 %v348
    %v370 = vunpack.c.l.b16 %v349
    %v371 = vunpack.c.l.b16 %v350
    %v372 = vunpack.c.l.b16 %v351
    %v373 = vunpack.c.l.b16 %v352
    %v374 = vpack.c.b16 %v368, %v367
    %v375 = vpack.c.b16 %v370, %v369
    %v376 = vpack.c.b16 %v372, %v371
    %v377 = vpack.c.b16 %v373, %v373
    %vm381 = vcmask 408576
    %v383 = vsel %vm381, %v345, 0
    %vm385 = vcmask 1040384
    %v387 = vsel %vm385, %v377, 0
    %389 = vmatprep.subr.bf16.mxu0 0
    %390 = vmatpush1.bf16.msra.mxu0 0
    %391 = vmatprep.subr.bf16.mxu0 0
    %392 = vmatpush1.bf16.msra.mxu0 0
    %393 = vmatprep.subr.bf16.mxu0 0
    %394 = vmatpush1.bf16.msra.mxu0 0
    %395 = vmatprep.subr.bf16.mxu0 0
    %396 = vmatpush1.bf16.msra.mxu0 0
    %397 = vmatprep.subr.bf16.mxu0 0
    %398 = vmatpush1.bf16.msra.mxu0 %v387
    %399 = vmatprep.subr.bf16.mxu0 0
    %400 = vmatpush1.bf16.msra.mxu0 %v376
    %401 = vmatprep.subr.bf16.mxu0 0
    %402 = vmatpush1.bf16.msra.mxu0 %v375
    %403 = vmatprep.subr.bf16.mxu0 0
    %404 = vmatpush1.bf16.msra.mxu0 %v374
    %405 = vmatprep.subr.bf16.mxu0 0
    %406 = vmatpush2.bf16.msra.mxu0 0
    %407 = vmatprep.subr.bf16.mxu0 0
    %408 = vmatpush2.bf16.msra.mxu0 0
    %409 = vmatprep.subr.bf16.mxu0 0
    %410 = vmatpush2.bf16.msra.mxu0 0
    %411 = vmatprep.subr.bf16.mxu0 0
    %412 = vmatpush2.bf16.msra.mxu0 0
    %413 = vmatprep.subr.bf16.mxu0 0
    %414 = vmatpush2.bf16.msra.mxu0 0
    %415 = vmatprep.subr.bf16.mxu0 0
    %416 = vmatpush2.bf16.msra.mxu0 0
    %417 = vmatprep.subr.bf16.mxu0 0
    %418 = vmatpush2.bf16.msra.mxu0 0
    %419 = vmatprep.subr.bf16.mxu0 0
    %420 = vmatpush2.bf16.msra.mxu0 0
    %421 = vmatprep.mubr.bf16.mxu0 0
    %422 = vmatmul.mubr.bf16.gmra.mxu0 %v383
    %v423 = vpop.f32.mrf.mxu0
    %v424 = vadd.f32 %v358, %v423
    %v425 = vpop.f32.mrf.mxu0
    %v426 = vpop.f32.mrf.mxu0
    %v427 = vpop.f32.mrf.mxu0
    %428 = vdwg.mxu0
    %429 = vmax.xlane.f32.xlu0 %v424
    %v430 = vpop.xlane.xlu0 %429
    %v431 = vsub.f32 %v424, %v430
    %v432 = vmul.f32 %v431, 1.442695
    %v433 = vpow.pop %v432
    %434 = vadd.xlane.f32.xlu0 %v433
    %v435 = vpop.xlane.xlu0 %434
    %v436 = vrcp.pop %v435
    %v437 = vmul.f32 %v433, %v436
    %vm438 = vcmask 64512
    %439 = vst.msk [vmem:[#allocation2] sm:$0xff] %vm438, %v437
    // Predicated region
    $region30: #{tpu_custom_call.1} parent=1 // pred_check
      _
    $region31: #{tpu_custom_call.1} parent=1 // pred_check_branch
      %441 = sbr.rel (0) target = $region33
    $region32: #{tpu_custom_call.1} parent=1 // pred_region
      %s443 = ssub.s32 128, 128
      %444 = vsyncadd [#allocation3], %s443
      %s446 = sshll.u32 [#allocation2], 4
      %s447 = int_to_ptr.vmem [resolvable:$true] %s446
      %449 = dma.vmem_to_hbm [thread:$0]  %s447, 128, %s7, [#allocation3]
    $region33: #{tpu_custom_call.1} parent=1 // pred_fallthru
      _
    // Predicated region
    $region34: #{tpu_custom_call.1} parent=1 // pred_check
      _
    $region35: #{tpu_custom_call.1} parent=1 // pred_check_branch
      %451 = sbr.rel (0) target = $region37
    $region36: #{tpu_custom_call.1} parent=1 // pred_region
      %452 = dma.done [#allocation3], 128
    $region37: #{tpu_custom_call.1} parent=1 // pred_fallthru
      _
    %453 = vsyncpa [#allocation3], 1

</llo_original>
